<compile_context>
chip_gen: v6e
topology: v6e:2x2x1
jax: 0.10.0
libtpu: 0.0.40
codegen_flags: <defaults>
</compile_context>

<pallas_src>
import functools

import jax
import jax.numpy as jnp
import numpy as np
from jax.experimental import pallas as pl
from jax.experimental.pallas import tpu as pltpu

EPS = 1e-5
LANE = 128


def _round_up(n, m):
    return ((n + m - 1) // m) * m


def _fused_batchnorm(h, gamma, beta, inv_batch):
    # Training-mode BatchNorm1d in one reduction pass:
    #   mu = sum(h)/B, var = sum(h*h)/B - mu^2 (biased), clamped at 0,
    # folded into a single scale/shift FMA.
    s = jnp.sum(h, axis=0, keepdims=True)
    ss = jnp.sum(h * h, axis=0, keepdims=True)
    mu = s * inv_batch
    var = jnp.maximum(ss * inv_batch - mu * mu, 0.0)
    scale = gamma * jax.lax.rsqrt(var + EPS)     # rsqrt -> EUP (free slot)
    shift = beta - mu * scale
    return h * scale + shift


def actor_kernel(x_ref, w1_ref, w2_ref, w3_ref, vec_ref, out_ref,
                 *, inv_batch, s, h1, h2, a):
    # vec_ref rows: 0/1 bn0 g/b (width s), 2/3 bn1 g/b (width h1),
    #               4/5 bn2 g/b (width h2), 6 fc3 bias (width a), 7 padding.
    x = x_ref[...]                                                   # (B, s) f32

    # bn0(state)
    h = _fused_batchnorm(x, vec_ref[0:1, :s], vec_ref[1:2, :s], inv_batch)

    # relu(bn1(fc1(x)))  — tiny K, keep f32; b1 cancelled by BN mean subtraction.
    h = jnp.dot(h, w1_ref[...], preferred_element_type=jnp.float32)
    h = jnp.maximum(
        _fused_batchnorm(h, vec_ref[2:3, :h1], vec_ref[3:4, :h1], inv_batch), 0.0)

    # relu(bn2(fc2(x)))  — bf16 operands on the MXU, f32 acc; b2 cancelled.
    h = jnp.dot(h.astype(jnp.bfloat16), w2_ref[...],
                preferred_element_type=jnp.float32)
    h = jnp.maximum(
        _fused_batchnorm(h, vec_ref[4:5, :h2], vec_ref[5:6, :h2], inv_batch), 0.0)

    # tanh(fc3(x) + b3)
    h = jnp.dot(h.astype(jnp.bfloat16), w3_ref[...],
                preferred_element_type=jnp.float32)
    out_ref[...] = jnp.tanh(h + vec_ref[6:7, :a])


def prepare_params(params):
    """One-time staging: pad lane dims, cast matmul weights, pack small vectors."""
    state_size, fc1 = params["w1"].shape
    fc2 = params["w2"].shape[1]
    act = params["w3"].shape[1]
    h1_p = _round_up(fc1, LANE)
    h2_p = _round_up(fc2, LANE)
    a_p = _round_up(act, LANE)
    vec_w = max(_round_up(state_size, LANE), h1_p, h2_p, a_p)

    def pad_row(v, width):
        v = jnp.asarray(v, jnp.float32).reshape(1, -1)
        return jnp.pad(v, ((0, 0), (0, width - v.shape[1])))

    vec = jnp.concatenate(
        [pad_row(params["bn0_g"], vec_w), pad_row(params["bn0_b"], vec_w),
         pad_row(params["bn1_g"], vec_w), pad_row(params["bn1_b"], vec_w),
         pad_row(params["bn2_g"], vec_w), pad_row(params["bn2_b"], vec_w),
         pad_row(params["b3"], vec_w),
         jnp.zeros((1, vec_w), jnp.float32)],                       # 8 sublanes
        axis=0)

    def pad2(a, rows, cols, dtype):
        a = jnp.asarray(a, jnp.float32)
        return jnp.pad(a, ((0, rows - a.shape[0]), (0, cols - a.shape[1]))).astype(dtype)

    return {
        "w1": pad2(params["w1"], state_size, h1_p, jnp.float32),    # (s, h1_p)
        "w2": pad2(params["w2"], h1_p, h2_p, jnp.bfloat16),         # (h1_p, h2_p)
        "w3": pad2(params["w3"], h2_p, a_p, jnp.bfloat16),          # (h2_p, a_p)
        "vec": vec,                                                 # (8, vec_w)
    }


@jax.jit
def actor_forward(state, prepped):
    """One Pallas call; returns lane-padded (B, a_pad) actions (slice at consumer)."""
    batch = state.shape[0]
    w1, w2, w3, vec = prepped["w1"], prepped["w2"], prepped["w3"], prepped["vec"]
    s, h1_p = w1.shape
    h2_p = w2.shape[1]
    a_p = w3.shape[1]

    flops = 2 * batch * (s * h1_p + h1_p * h2_p + h2_p * a_p)
    transcendentals = batch * a_p + (s + h1_p + h2_p)               # tanh + rsqrt
    bytes_accessed = (batch * s * 4 + s * h1_p * 4
                      + (h1_p * h2_p + h2_p * a_p) * 2
                      + vec.size * 4 + batch * a_p * 4)

    vmem = pl.BlockSpec(memory_space=pltpu.MemorySpace.VMEM)
    return pl.pallas_call(
        functools.partial(actor_kernel, inv_batch=1.0 / batch,
                          s=s, h1=h1_p, h2=h2_p, a=a_p),
        out_shape=jax.ShapeDtypeStruct((batch, a_p), jnp.float32),
        in_specs=[vmem] * 5,
        out_specs=vmem,
        compiler_params=pltpu.CompilerParams(vmem_limit_bytes=4 << 20),
        cost_estimate=pl.CostEstimate(flops=flops,
                                      transcendentals=transcendentals,
                                      bytes_accessed=bytes_accessed),
    )(state.astype(jnp.float32), w1, w2, w3, vec)


def init_actor_params(key, state_size, action_size, fc1_units, fc2_units):
    """Deterministic init mirroring Actor.__init__/reset_parameters (weights (in, out))."""
    k1, k2, k3, k1b, k2b, k3b = jax.random.split(key, 6)

    # hidden_init uses weight.size()[0] == out_features (quirk of the reference code).
    lim1 = 1.0 / np.sqrt(fc1_units)
    lim2 = 1.0 / np.sqrt(fc2_units)

    def u(k, shape, lo, hi):
        return jax.random.uniform(k, shape, jnp.float32, lo, hi)

    return {
        "bn0_g": jnp.ones((1, state_size), jnp.float32),
        "bn0_b": jnp.zeros((1, state_size), jnp.float32),
        "bn1_g": jnp.ones((1, fc1_units), jnp.float32),
        "bn1_b": jnp.zeros((1, fc1_units), jnp.float32),
        "bn2_g": jnp.ones((1, fc2_units), jnp.float32),
        "bn2_b": jnp.zeros((1, fc2_units), jnp.float32),
        "w1": u(k1, (state_size, fc1_units), -lim1, lim1),
        "b1": u(k1b, (1, fc1_units), -1.0 / np.sqrt(state_size), 1.0 / np.sqrt(state_size)),
        "w2": u(k2, (fc1_units, fc2_units), -lim2, lim2),
        "b2": u(k2b, (1, fc2_units), -1.0 / np.sqrt(fc1_units), 1.0 / np.sqrt(fc1_units)),
        "w3": u(k3, (fc2_units, action_size), -0.003, 0.003),
        "b3": u(k3b, (1, action_size), -1.0 / np.sqrt(fc2_units), 1.0 / np.sqrt(fc2_units)),
    }


def actor_forward_ref_bf16(state, p):
    """Pure-JAX reference mirroring the kernel arithmetic exactly
    (f32 fc1, bf16 fc2/fc3, fused one-pass BN, b1/b2 dropped)."""
    inv_b = 1.0 / state.shape[0]

    def bn(h, g, b):
        mu = jnp.sum(h, axis=0, keepdims=True) * inv_b
        var = jnp.maximum(jnp.sum(h * h, axis=0, keepdims=True) * inv_b - mu * mu, 0.0)
        scale = g * jax.lax.rsqrt(var + EPS)
        return h * scale + (b - mu * scale)

    def bdot(h, w):
        return jnp.dot(h.astype(jnp.bfloat16), w.astype(jnp.bfloat16),
                       preferred_element_type=jnp.float32)

    h = bn(state, p["bn0_g"], p["bn0_b"])
    h = jnp.maximum(bn(jnp.dot(h, p["w1"], preferred_element_type=jnp.float32),
                       p["bn1_g"], p["bn1_b"]), 0.0)
    h = jnp.maximum(bn(bdot(h, p["w2"]), p["bn2_g"], p["bn2_b"]), 0.0)
    return jnp.tanh(bdot(h, p["w3"]) + p["b3"])


def actor_forward_ref_f32(state, p):
    """Pure-JAX f32 reference of the original module semantics (training-mode BN)."""
    def bn(h, g, b):
        mu = jnp.mean(h, axis=0, keepdims=True)
        var = jnp.mean((h - mu) ** 2, axis=0, keepdims=True)
        return (h - mu) / jnp.sqrt(var + EPS) * g + b

    h = bn(state, p["bn0_g"], p["bn0_b"])
    h = jnp.maximum(bn(h @ p["w1"] + p["b1"], p["bn1_g"], p["bn1_b"]), 0.0)
    h = jnp.maximum(bn(h @ p["w2"] + p["b2"], p["bn2_g"], p["bn2_b"]), 0.0)
    return jnp.tanh(h @ p["w3"] + p["b3"])


if __name__ == "__main__":
    # Small, module-consistent shapes.
    batch = 8
    state_size = 32
    action_size = 8
    fc1_units = 128
    fc2_units = 128

    key = jax.random.PRNGKey(0)
    k_params, k_state = jax.random.split(key)

    params = init_actor_params(k_params, state_size, action_size, fc1_units, fc2_units)
    prepped = prepare_params(params)                      # one-time staging (out of hot path)
    state = jax.random.normal(k_state, (batch, state_size), jnp.float32)

    out_padded = jax.block_until_ready(actor_forward(state, prepped))
    out = np.asarray(out_padded)[:, :action_size]         # consumer-side slice

    # Tight check vs. a reference mirroring the kernel arithmetic exactly.
    ref_bf16 = np.asarray(actor_forward_ref_bf16(state, params))
    np.testing.assert_allclose(out, ref_bf16, rtol=5e-3, atol=2e-4)

    # Looser sanity check vs. full-f32 module semantics (bf16-matmul rounding only).
    ref_f32 = np.asarray(actor_forward_ref_f32(state, params))
    np.testing.assert_allclose(out, ref_f32, rtol=5e-2, atol=5e-3)

    print("KERNEL_OK")
</pallas_src>

<mosaic_0001>
module attributes {stable_mosaic.version = 11 : i64} {
  func.func @actor_kernel(%arg0: memref<8x32xf32, #tpu.memory_space<vmem>>, %arg1: memref<32x128xf32, #tpu.memory_space<vmem>>, %arg2: memref<128x128xbf16, #tpu.memory_space<vmem>>, %arg3: memref<128x128xbf16, #tpu.memory_space<vmem>>, %arg4: memref<8x128xf32, #tpu.memory_space<vmem>>, %arg5: memref<8x128xf32, #tpu.memory_space<vmem>>) attributes {dimension_semantics = [], scalar_prefetch = 0 : i64, scratch_operands = 0 : i64, tpu.core_type = #tpu.core_type<tc>} {
    %c0 = arith.constant 0 : index
    %c0_0 = arith.constant 0 : index
    %0 = vector.load %arg0[%c0, %c0_0] : memref<8x32xf32, #tpu.memory_space<vmem>>, vector<8x32xf32>
    %c0_1 = arith.constant 0 : index
    %c0_2 = arith.constant 0 : index
    %1 = vector.load %arg4[%c0_1, %c0_2] : memref<8x128xf32, #tpu.memory_space<vmem>>, vector<1x32xf32>
    %c1 = arith.constant 1 : index
    %c0_3 = arith.constant 0 : index
    %2 = vector.load %arg4[%c1, %c0_3] : memref<8x128xf32, #tpu.memory_space<vmem>>, vector<1x32xf32>
    %cst = arith.constant dense<0.000000e+00> : vector<32xf32>
    %3 = vector.multi_reduction <add>, %0, %cst [0] : vector<8x32xf32> to vector<32xf32>
    %4 = vector.shape_cast %3 : vector<32xf32> to vector<1x32xf32>
    %5 = arith.mulf %0, %0 : vector<8x32xf32>
    %cst_4 = arith.constant dense<0.000000e+00> : vector<32xf32>
    %6 = vector.multi_reduction <add>, %5, %cst_4 [0] : vector<8x32xf32> to vector<32xf32>
    %7 = vector.shape_cast %6 : vector<32xf32> to vector<1x32xf32>
    %cst_5 = arith.constant 1.250000e-01 : f32
    %8 = vector.broadcast %cst_5 : f32 to vector<1x32xf32>
    %9 = arith.mulf %4, %8 : vector<1x32xf32>
    %cst_6 = arith.constant 1.250000e-01 : f32
    %10 = vector.broadcast %cst_6 : f32 to vector<1x32xf32>
    %11 = arith.mulf %7, %10 : vector<1x32xf32>
    %12 = arith.mulf %9, %9 : vector<1x32xf32>
    %13 = arith.subf %11, %12 : vector<1x32xf32>
    %cst_7 = arith.constant 0.000000e+00 : f32
    %14 = vector.broadcast %cst_7 : f32 to vector<1x32xf32>
    %15 = arith.maximumf %13, %14 : vector<1x32xf32>
    %cst_8 = arith.constant 9.99999974E-6 : f32
    %16 = vector.broadcast %cst_8 : f32 to vector<1x32xf32>
    %17 = arith.addf %15, %16 : vector<1x32xf32>
    %18 = math.rsqrt %17 : vector<1x32xf32>
    %19 = arith.mulf %1, %18 : vector<1x32xf32>
    %20 = arith.mulf %9, %19 : vector<1x32xf32>
    %21 = arith.subf %2, %20 : vector<1x32xf32>
    %22 = vector.broadcast %19 : vector<1x32xf32> to vector<8x32xf32>
    %23 = arith.mulf %0, %22 : vector<8x32xf32>
    %24 = vector.broadcast %21 : vector<1x32xf32> to vector<8x32xf32>
    %25 = arith.addf %23, %24 : vector<8x32xf32>
    %c0_9 = arith.constant 0 : index
    %c0_10 = arith.constant 0 : index
    %26 = vector.load %arg1[%c0_9, %c0_10] : memref<32x128xf32, #tpu.memory_space<vmem>>, vector<32x128xf32>
    %cst_11 = arith.constant dense<0.000000e+00> : vector<8x128xf32>
    %27 = tpu.matmul %25, %26, %cst_11 {dimension_numbers = #tpu.dot_dimension_numbers<[1], [0], [0], [1], [0, 0, 1, 1], [], []>} : vector<8x32xf32>, vector<32x128xf32>, vector<8x128xf32> -> vector<8x128xf32>
    %c2 = arith.constant 2 : index
    %c0_12 = arith.constant 0 : index
    %28 = vector.load %arg4[%c2, %c0_12] : memref<8x128xf32, #tpu.memory_space<vmem>>, vector<1x128xf32>
    %c3 = arith.constant 3 : index
    %c0_13 = arith.constant 0 : index
    %29 = vector.load %arg4[%c3, %c0_13] : memref<8x128xf32, #tpu.memory_space<vmem>>, vector<1x128xf32>
    %cst_14 = arith.constant dense<0.000000e+00> : vector<128xf32>
    %30 = vector.multi_reduction <add>, %27, %cst_14 [0] : vector<8x128xf32> to vector<128xf32>
    %31 = vector.shape_cast %30 : vector<128xf32> to vector<1x128xf32>
    %32 = arith.mulf %27, %27 : vector<8x128xf32>
    %cst_15 = arith.constant dense<0.000000e+00> : vector<128xf32>
    %33 = vector.multi_reduction <add>, %32, %cst_15 [0] : vector<8x128xf32> to vector<128xf32>
    %34 = vector.shape_cast %33 : vector<128xf32> to vector<1x128xf32>
    %cst_16 = arith.constant 1.250000e-01 : f32
    %35 = vector.broadcast %cst_16 : f32 to vector<1x128xf32>
    %36 = arith.mulf %31, %35 : vector<1x128xf32>
    %cst_17 = arith.constant 1.250000e-01 : f32
    %37 = vector.broadcast %cst_17 : f32 to vector<1x128xf32>
    %38 = arith.mulf %34, %37 : vector<1x128xf32>
    %39 = arith.mulf %36, %36 : vector<1x128xf32>
    %40 = arith.subf %38, %39 : vector<1x128xf32>
    %cst_18 = arith.constant 0.000000e+00 : f32
    %41 = vector.broadcast %cst_18 : f32 to vector<1x128xf32>
    %42 = arith.maximumf %40, %41 : vector<1x128xf32>
    %cst_19 = arith.constant 9.99999974E-6 : f32
    %43 = vector.broadcast %cst_19 : f32 to vector<1x128xf32>
    %44 = arith.addf %42, %43 : vector<1x128xf32>
    %45 = math.rsqrt %44 : vector<1x128xf32>
    %46 = arith.mulf %28, %45 : vector<1x128xf32>
    %47 = arith.mulf %36, %46 : vector<1x128xf32>
    %48 = arith.subf %29, %47 : vector<1x128xf32>
    %49 = vector.broadcast %46 : vector<1x128xf32> to vector<8x128xf32>
    %50 = arith.mulf %27, %49 : vector<8x128xf32>
    %51 = vector.broadcast %48 : vector<1x128xf32> to vector<8x128xf32>
    %52 = arith.addf %50, %51 : vector<8x128xf32>
    %cst_20 = arith.constant 0.000000e+00 : f32
    %53 = vector.broadcast %cst_20 : f32 to vector<8x128xf32>
    %54 = arith.maximumf %52, %53 : vector<8x128xf32>
    %55 = arith.truncf %54 : vector<8x128xf32> to vector<8x128xbf16>
    %c0_21 = arith.constant 0 : index
    %c0_22 = arith.constant 0 : index
    %56 = vector.load %arg2[%c0_21, %c0_22] : memref<128x128xbf16, #tpu.memory_space<vmem>>, vector<128x128xbf16>
    %cst_23 = arith.constant dense<0.000000e+00> : vector<8x128xf32>
    %57 = tpu.matmul %55, %56, %cst_23 {dimension_numbers = #tpu.dot_dimension_numbers<[1], [0], [0], [1], [0, 0, 1, 1], [], []>} : vector<8x128xbf16>, vector<128x128xbf16>, vector<8x128xf32> -> vector<8x128xf32>
    %c4 = arith.constant 4 : index
    %c0_24 = arith.constant 0 : index
    %58 = vector.load %arg4[%c4, %c0_24] : memref<8x128xf32, #tpu.memory_space<vmem>>, vector<1x128xf32>
    %c5 = arith.constant 5 : index
    %c0_25 = arith.constant 0 : index
    %59 = vector.load %arg4[%c5, %c0_25] : memref<8x128xf32, #tpu.memory_space<vmem>>, vector<1x128xf32>
    %cst_26 = arith.constant dense<0.000000e+00> : vector<128xf32>
    %60 = vector.multi_reduction <add>, %57, %cst_26 [0] : vector<8x128xf32> to vector<128xf32>
    %61 = vector.shape_cast %60 : vector<128xf32> to vector<1x128xf32>
    %62 = arith.mulf %57, %57 : vector<8x128xf32>
    %cst_27 = arith.constant dense<0.000000e+00> : vector<128xf32>
    %63 = vector.multi_reduction <add>, %62, %cst_27 [0] : vector<8x128xf32> to vector<128xf32>
    %64 = vector.shape_cast %63 : vector<128xf32> to vector<1x128xf32>
    %cst_28 = arith.constant 1.250000e-01 : f32
    %65 = vector.broadcast %cst_28 : f32 to vector<1x128xf32>
    %66 = arith.mulf %61, %65 : vector<1x128xf32>
    %cst_29 = arith.constant 1.250000e-01 : f32
    %67 = vector.broadcast %cst_29 : f32 to vector<1x128xf32>
    %68 = arith.mulf %64, %67 : vector<1x128xf32>
    %69 = arith.mulf %66, %66 : vector<1x128xf32>
    %70 = arith.subf %68, %69 : vector<1x128xf32>
    %cst_30 = arith.constant 0.000000e+00 : f32
    %71 = vector.broadcast %cst_30 : f32 to vector<1x128xf32>
    %72 = arith.maximumf %70, %71 : vector<1x128xf32>
    %cst_31 = arith.constant 9.99999974E-6 : f32
    %73 = vector.broadcast %cst_31 : f32 to vector<1x128xf32>
    %74 = arith.addf %72, %73 : vector<1x128xf32>
    %75 = math.rsqrt %74 : vector<1x128xf32>
    %76 = arith.mulf %58, %75 : vector<1x128xf32>
    %77 = arith.mulf %66, %76 : vector<1x128xf32>
    %78 = arith.subf %59, %77 : vector<1x128xf32>
    %79 = vector.broadcast %76 : vector<1x128xf32> to vector<8x128xf32>
    %80 = arith.mulf %57, %79 : vector<8x128xf32>
    %81 = vector.broadcast %78 : vector<1x128xf32> to vector<8x128xf32>
    %82 = arith.addf %80, %81 : vector<8x128xf32>
    %cst_32 = arith.constant 0.000000e+00 : f32
    %83 = vector.broadcast %cst_32 : f32 to vector<8x128xf32>
    %84 = arith.maximumf %82, %83 : vector<8x128xf32>
    %85 = arith.truncf %84 : vector<8x128xf32> to vector<8x128xbf16>
    %c0_33 = arith.constant 0 : index
    %c0_34 = arith.constant 0 : index
    %86 = vector.load %arg3[%c0_33, %c0_34] : memref<128x128xbf16, #tpu.memory_space<vmem>>, vector<128x128xbf16>
    %cst_35 = arith.constant dense<0.000000e+00> : vector<8x128xf32>
    %87 = tpu.matmul %85, %86, %cst_35 {dimension_numbers = #tpu.dot_dimension_numbers<[1], [0], [0], [1], [0, 0, 1, 1], [], []>} : vector<8x128xbf16>, vector<128x128xbf16>, vector<8x128xf32> -> vector<8x128xf32>
    %c6 = arith.constant 6 : index
    %c0_36 = arith.constant 0 : index
    %88 = vector.load %arg4[%c6, %c0_36] : memref<8x128xf32, #tpu.memory_space<vmem>>, vector<1x128xf32>
    %89 = vector.broadcast %88 : vector<1x128xf32> to vector<8x128xf32>
    %90 = arith.addf %87, %89 : vector<8x128xf32>
    %91 = math.tanh %90 : vector<8x128xf32>
    %c0_37 = arith.constant 0 : index
    %c0_38 = arith.constant 0 : index
    %92 = vector.load %arg5[%c0_37, %c0_38] : memref<8x128xf32, #tpu.memory_space<vmem>>, vector<8x128xf32>
    tpu.vector_store %arg5[%c0_37, %c0_38], %91 {strides = array<i32>} : memref<8x128xf32, #tpu.memory_space<vmem>>, vector<8x128xf32>,
    return
  }
}

</mosaic_0001>

<llo_original>
// kernel: actor_forward.1
$region0: #{actor_forward.1}
  #allocation0 [shape = 'u32[]', space=smem, size = 0x4, offset = 0x4, fixed_abs, tag = 'smem constant byte address 0x4 - core index']
  #allocation1 [shape = 'u32[144,128]{1,0:T(1,128)}', space=vmem, size = 0x12000, scoped, tag = 'internal scratch']
  %s0 = inlined_call_operand.hbm [shape: f32[8,32], index: 0, kind: input, shape index: {}]
  %s1 = inlined_call_operand.hbm [shape: f32[32,128], index: 1, kind: input, shape index: {}]
  %s2 = inlined_call_operand.hbm [shape: bf16[128,128], index: 2, kind: input, shape index: {}]
  %s3 = inlined_call_operand.hbm [shape: bf16[128,128], index: 3, kind: input, shape index: {}]
  %s4 = inlined_call_operand.hbm [shape: f32[8,128], index: 4, kind: input, shape index: {}]
  %s5 = inlined_call_operand.hbm [shape: f32[8,128], index: 5, kind: output, shape index: {}]
  %s6 = sld [smem:[#allocation0]]
  $region50: #{actor_forward.1} parent=0
    _
  %s8 = ssub.s32 1, %s6
  %s9 = scalar_select 0, %s8, %s6
  $region1: #{actor_forward.1} parent=0
    #allocation2 [shape = 'u8[4096]{0}', space=vmem, size = 0x1000, scoped, tag = 'input window, operand 0, single buffered']
    #allocation3 [shape = 's32[1]{0}', space=sflag, size = 0x4, scoped, tag = 'scoped memory for actor_forward.1']
    #allocation4 [shape = 's32[1]{0}', space=sflag, size = 0x4, scoped, tag = 'scoped memory for actor_forward.1']
    #allocation5 [shape = 'u8[16384]{0}', space=vmem, size = 0x4000, scoped, tag = 'input window, operand 1, single buffered']
    #allocation6 [shape = 's32[1]{0}', space=sflag, size = 0x4, scoped, tag = 'scoped memory for actor_forward.1']
    #allocation7 [shape = 'u8[32768]{0}', space=vmem, size = 0x8000, scoped, tag = 'input window, operand 2, single buffered']
    #allocation8 [shape = 'u8[32768]{0}', space=vmem, size = 0x8000, scoped, tag = 'input window, operand 3, single buffered']
    #allocation9 [shape = 's32[1]{0}', space=sflag, size = 0x4, scoped, tag = 'scoped memory for actor_forward.1']
    #allocation10 [shape = 'u8[4096]{0}', space=vmem, size = 0x1000, scoped, tag = 'input window, operand 4, single buffered']
    #allocation11 [shape = 'u8[4096]{0}', space=vmem, size = 0x1000, scoped, tag = 'output window, operand 0, single buffered']
    %10 = vsyncpa [#allocation3], 0
    %11 = vsyncpa [#allocation6], 0
    %12 = vsyncpa [#allocation9], 0
    %13 = vsyncpa [#allocation4], 0
    // Predicated region
    $region2: #{actor_forward.1} parent=1 // pred_check
      _
    $region3: #{actor_forward.1} parent=1 // pred_check_branch
      %15 = sbr.rel (0) target = $region5
    $region4: #{actor_forward.1} parent=1 // pred_region
      %s17 = ssub.s32 128, 128
      %18 = vsyncadd [#allocation3], %s17
      %s20 = sshll.u32 [#allocation2], 4
      %s21 = int_to_ptr.vmem [resolvable:$true] %s20
      %23 = dma.hbm_to_vmem [thread:$0]  %s0, 128, %s21, [#allocation3]
    $region5: #{actor_forward.1} parent=1 // pred_fallthru
      _
    // Predicated region
    $region6: #{actor_forward.1} parent=1 // pred_check
      _
    $region7: #{actor_forward.1} parent=1 // pred_check_branch
      %25 = sbr.rel (0) target = $region9
    $region8: #{actor_forward.1} parent=1 // pred_region
      %s27 = ssub.s32 512, 512
      %28 = vsyncadd [#allocation6], %s27
      %s29 = sshll.u32 [#allocation5], 4
      %s30 = int_to_ptr.vmem [resolvable:$true] %s29
      %35 = dma.hbm_to_vmem [thread:$0]  %s1, 512, %s30, [#allocation6], 128, 128, 8
    $region9: #{actor_forward.1} parent=1 // pred_fallthru
      _
    // Predicated region
    $region10: #{actor_forward.1} parent=1 // pred_check
      _
    $region11: #{actor_forward.1} parent=1 // pred_check_branch
      %37 = sbr.rel (0) target = $region13
    $region12: #{actor_forward.1} parent=1 // pred_region
      %s39 = ssub.s32 1024, 1024
      %40 = vsyncadd [#allocation6], %s39
      %s41 = sshll.u32 [#allocation7], 4
      %s42 = int_to_ptr.vmem [resolvable:$true] %s41
      %47 = dma.hbm_to_vmem [thread:$0]  %s2, 1024, %s42, [#allocation6], 64, 64, 4
    $region13: #{actor_forward.1} parent=1 // pred_fallthru
      _
    // Predicated region
    $region14: #{actor_forward.1} parent=1 // pred_check
      _
    $region15: #{actor_forward.1} parent=1 // pred_check_branch
      %49 = sbr.rel (0) target = $region17
    $region16: #{actor_forward.1} parent=1 // pred_region
      %s51 = ssub.s32 1024, 1024
      %52 = vsyncadd [#allocation9], %s51
      %s53 = sshll.u32 [#allocation8], 4
      %s54 = int_to_ptr.vmem [resolvable:$true] %s53
      %59 = dma.hbm_to_vmem [thread:$0]  %s3, 1024, %s54, [#allocation9], 64, 64, 4
    $region17: #{actor_forward.1} parent=1 // pred_fallthru
      _
    // Predicated region
    $region18: #{actor_forward.1} parent=1 // pred_check
      _
    $region19: #{actor_forward.1} parent=1 // pred_check_branch
      %61 = sbr.rel (0) target = $region21
    $region20: #{actor_forward.1} parent=1 // pred_region
      %s63 = ssub.s32 128, 128
      %64 = vsyncadd [#allocation9], %s63
      %s66 = sshll.u32 [#allocation10], 4
      %s67 = int_to_ptr.vmem [resolvable:$true] %s66
      %69 = dma.hbm_to_vmem [thread:$0]  %s4, 128, %s67, [#allocation9]
    $region21: #{actor_forward.1} parent=1 // pred_fallthru
      _
    // Predicated region
    $region22: #{actor_forward.1} parent=1 // pred_check
      _
    $region23: #{actor_forward.1} parent=1 // pred_check_branch
      %71 = sbr.rel (0) target = $region25
    $region24: #{actor_forward.1} parent=1 // pred_region
      %72 = dma.done [#allocation3], 128
    $region25: #{actor_forward.1} parent=1 // pred_fallthru
      _
    // Predicated region
    $region26: #{actor_forward.1} parent=1 // pred_check
      _
    $region27: #{actor_forward.1} parent=1 // pred_check_branch
      %74 = sbr.rel (0) target = $region29
    $region28: #{actor_forward.1} parent=1 // pred_region
      %75 = dma.done [#allocation6], 512
    $region29: #{actor_forward.1} parent=1 // pred_fallthru
      _
    // Predicated region
    $region30: #{actor_forward.1} parent=1 // pred_check
      _
    $region31: #{actor_forward.1} parent=1 // pred_check_branch
      %77 = sbr.rel (0) target = $region33
    $region32: #{actor_forward.1} parent=1 // pred_region
      %78 = dma.done [#allocation6], 1024
    $region33: #{actor_forward.1} parent=1 // pred_fallthru
      _
    // Predicated region
    $region34: #{actor_forward.1} parent=1 // pred_check
      _
    $region35: #{actor_forward.1} parent=1 // pred_check_branch
      %80 = sbr.rel (0) target = $region37
    $region36: #{actor_forward.1} parent=1 // pred_region
      %81 = dma.done [#allocation9], 1024
    $region37: #{actor_forward.1} parent=1 // pred_fallthru
      _
    // Predicated region
    $region38: #{actor_forward.1} parent=1 // pred_check
      _
    $region39: #{actor_forward.1} parent=1 // pred_check_branch
      %83 = sbr.rel (0) target = $region41
    $region40: #{actor_forward.1} parent=1 // pred_region
      %84 = dma.done [#allocation9], 128
    $region41: #{actor_forward.1} parent=1 // pred_fallthru
      _
    %v86 = vld [vmem:[#allocation2] sm:$0xff]
    %v87 = vld [vmem:[#allocation10] sm:$0x1]
    %v88 = vld [vmem:[#allocation10 + $0x1] sm:$0x1]
    %vm89 = vcmask 261120
    %v90 = vsel %vm89, %v86, 0.0
    %v91 = vrot.slane %v90, 4
    %v92 = vadd.f32 %v90, %v91
    %v93 = vrot.slane %v92, 2
    %v94 = vadd.f32 %v92, %v93
    %v95 = vrot.slane %v94, 1
    %v96 = vadd.f32 %v94, %v95
    %v97 = vmul.f32 %v86, %v86
    %v98 = vsel %vm89, %v97, 0.0
    %v99 = vrot.slane %v98, 4
    %v100 = vadd.f32 %v98, %v99
    %v101 = vrot.slane %v100, 2
    %v102 = vadd.f32 %v100, %v101
    %v103 = vrot.slane %v102, 1
    %v104 = vadd.f32 %v102, %v103
    %v105 = vmul.f32 %v96, 0.125
    %v106 = vmul.f32 %v104, 0.125
    %v107 = vmul.f32 %v105, %v105
    %v108 = vsub.f32 %v106, %v107
    %v109 = vmax.f32 %v108, 0.0
    %v110 = vadd.f32 %v109, 1e-05
    %v111 = vrsqrt.pop %v110
    %v112 = vmul.f32 %v87, %v111
    %v113 = vmul.f32 %v105, %v112
    %v114 = vsub.f32 %v88, %v113
    %v115 = vlaneseq
    %v116 = vshrl.u32 %v115, 7
    %v117 = vsub.s32 0, %v116
    %v118 = vrot.slane %v112, %v117
    %v119 = vmul.f32 %v86, %v118
    %v120 = vlaneseq
    %v121 = vshrl.u32 %v120, 7
    %v122 = vsub.s32 0, %v121
    %v123 = vrot.slane %v114, %v122
    %v124 = vadd.f32 %v119, %v123
    %v125 = vld [vmem:[#allocation5] sm:$0xff]
    %v126 = vld [vmem:[#allocation5 + $0x8] sm:$0xff]
    %v127 = vld [vmem:[#allocation5 + $0x10] sm:$0xff]
    %v128 = vld [vmem:[#allocation5 + $0x18] sm:$0xff]
    %v130 = vsel %vm89, %v124, 0
    %132 = vmatprep.subr.mxu0 0.0
    %133 = vmatpush1.msra.mxu0 0.0
    %134 = vmatprep.subr.mxu0 0.0
    %135 = vmatpush1.msra.mxu0 0.0
    %136 = vmatprep.subr.mxu0 0.0
    %137 = vmatpush1.msra.mxu0 0.0
    %138 = vmatprep.subr.mxu0 0.0
    %139 = vmatpush1.msra.mxu0 0.0
    %140 = vmatprep.subr.mxu0 0.0
    %141 = vmatpush1.msra.mxu0 0.0
    %142 = vmatprep.subr.mxu0 0.0
    %143 = vmatpush1.msra.mxu0 0.0
    %144 = vmatprep.subr.mxu0 0.0
    %145 = vmatpush1.msra.mxu0 0.0
    %146 = vmatprep.subr.mxu0 0.0
    %147 = vmatpush1.msra.mxu0 0.0
    %148 = vmatprep.subr.mxu0 0.0
    %149 = vmatpush1.msra.mxu0 0.0
    %150 = vmatprep.subr.mxu0 0.0
    %151 = vmatpush1.msra.mxu0 0.0
    %152 = vmatprep.subr.mxu0 0.0
    %153 = vmatpush1.msra.mxu0 0.0
    %154 = vmatprep.subr.mxu0 0.0
    %155 = vmatpush1.msra.mxu0 0.0
    %156 = vmatprep.subr.mxu0 0.0
    %157 = vmatpush1.msra.mxu0 %v128
    %158 = vmatprep.subr.mxu0 0.0
    %159 = vmatpush1.msra.mxu0 %v127
    %160 = vmatprep.subr.mxu0 0.0
    %161 = vmatpush1.msra.mxu0 %v126
    %162 = vmatprep.subr.mxu0 0.0
    %163 = vmatpush1.msra.mxu0 %v125
    %164 = vmatprep.subr.mxu0 0.0
    %165 = vmatpush2.msra.mxu0 0.0
    %166 = vmatprep.subr.mxu0 0.0
    %167 = vmatpush2.msra.mxu0 0.0
    %168 = vmatprep.subr.mxu0 0.0
    %169 = vmatpush2.msra.mxu0 0.0
    %170 = vmatprep.subr.mxu0 0.0
    %171 = vmatpush2.msra.mxu0 0.0
    %172 = vmatprep.subr.mxu0 0.0
    %173 = vmatpush2.msra.mxu0 0.0
    %174 = vmatprep.subr.mxu0 0.0
    %175 = vmatpush2.msra.mxu0 0.0
    %176 = vmatprep.subr.mxu0 0.0
    %177 = vmatpush2.msra.mxu0 0.0
    %178 = vmatprep.subr.mxu0 0.0
    %179 = vmatpush2.msra.mxu0 0.0
    %180 = vmatprep.subr.mxu0 0.0
    %181 = vmatpush2.msra.mxu0 0.0
    %182 = vmatprep.subr.mxu0 0.0
    %183 = vmatpush2.msra.mxu0 0.0
    %184 = vmatprep.subr.mxu0 0.0
    %185 = vmatpush2.msra.mxu0 0.0
    %186 = vmatprep.subr.mxu0 0.0
    %187 = vmatpush2.msra.mxu0 0.0
    %188 = vmatprep.subr.mxu0 0.0
    %189 = vmatpush2.msra.mxu0 0.0
    %190 = vmatprep.subr.mxu0 0.0
    %191 = vmatpush2.msra.mxu0 0.0
    %192 = vmatprep.subr.mxu0 0.0
    %193 = vmatpush2.msra.mxu0 0.0
    %194 = vmatprep.subr.mxu0 0.0
    %195 = vmatpush2.msra.mxu0 0.0
    %196 = vmatprep.mubr.f32.mxu0 0.0
    %197 = vmatmul.mubr.f32.gmra.mxu0 %v130
    %v198 = vpop.f32.mrf.mxu0
    %v199 = vadd.f32 0.0, %v198
    %v200 = vpop.f32.mrf.mxu0
    %201 = vdwg.mxu0
    %v202 = vld [vmem:[#allocation10 + $0x2] sm:$0x1]
    %v203 = vld [vmem:[#allocation10 + $0x3] sm:$0x1]
    %v204 = vrot.slane %v199, 4
    %v205 = vadd.f32 %v199, %v204
    %v206 = vrot.slane %v205, 2
    %v207 = vadd.f32 %v205, %v206
    %v208 = vrot.slane %v207, 1
    %v209 = vadd.f32 %v207, %v208
    %v210 = vmul.f32 %v199, %v199
    %v211 = vrot.slane %v210, 4
    %v212 = vadd.f32 %v210, %v211
    %v213 = vrot.slane %v212, 2
    %v214 = vadd.f32 %v212, %v213
    %v215 = vrot.slane %v214, 1
    %v216 = vadd.f32 %v214, %v215
    %v217 = vmul.f32 %v209, 0.125
    %v218 = vmul.f32 %v216, 0.125
    %v219 = vmul.f32 %v217, %v217
    %v220 = vsub.f32 %v218, %v219
    %v221 = vmax.f32 %v220, 0.0
    %v222 = vadd.f32 %v221, 1e-05
    %v223 = vrsqrt.pop %v222
    %v224 = vmul.f32 %v202, %v223
    %v225 = vmul.f32 %v217, %v224
    %v226 = vsub.f32 %v203, %v225
    %v227 = vlaneseq
    %v228 = vshrl.u32 %v227, 7
    %v229 = vsub.s32 0, %v228
    %v230 = vrot.slane %v224, %v229
    %v231 = vmul.f32 %v199, %v230
    %v232 = vlaneseq
    %v233 = vshrl.u32 %v232, 7
    %v234 = vsub.s32 0, %v233
    %v235 = vrot.slane %v226, %v234
    %v236 = vadd.f32 %v231, %v235
    %v237 = vmax.f32 %v236, 0.0
    %v238 = vpack.c.bf16 %v237, %v237
    %v239 = vld [vmem:[#allocation7] sm:$0xf]
    %v240 = vld [vmem:[#allocation7 + $0x4] sm:$0xf]
    %v241 = vld [vmem:[#allocation7 + $0x8] sm:$0xf]
    %v242 = vld [vmem:[#allocation7 + $0xc] sm:$0xf]
    %v243 = vld [vmem:[#allocation7 + $0x10] sm:$0xf]
    %v244 = vld [vmem:[#allocation7 + $0x14] sm:$0xf]
    %v245 = vld [vmem:[#allocation7 + $0x18] sm:$0xf]
    %v246 = vld [vmem:[#allocation7 + $0x1c] sm:$0xf]
    %v247 = vld [vmem:[#allocation7 + $0x20] sm:$0xf]
    %v248 = vld [vmem:[#allocation7 + $0x24] sm:$0xf]
    %v249 = vld [vmem:[#allocation7 + $0x28] sm:$0xf]
    %v250 = vld [vmem:[#allocation7 + $0x2c] sm:$0xf]
    %v251 = vld [vmem:[#allocation7 + $0x30] sm:$0xf]
    %v252 = vld [vmem:[#allocation7 + $0x34] sm:$0xf]
    %v253 = vld [vmem:[#allocation7 + $0x38] sm:$0xf]
    %v254 = vld [vmem:[#allocation7 + $0x3c] sm:$0xf]
    %v271 = vunpack.c.l.b16 %v239
    %v272 = vunpack.c.l.b16 %v240
    %v273 = vunpack.c.l.b16 %v241
    %v274 = vunpack.c.l.b16 %v242
    %v275 = vunpack.c.l.b16 %v243
    %v276 = vunpack.c.l.b16 %v244
    %v277 = vunpack.c.l.b16 %v245
    %v278 = vunpack.c.l.b16 %v246
    %v279 = vunpack.c.l.b16 %v247
    %v280 = vunpack.c.l.b16 %v248
    %v281 = vunpack.c.l.b16 %v249
    %v282 = vunpack.c.l.b16 %v250
    %v283 = vunpack.c.l.b16 %v251
    %v284 = vunpack.c.l.b16 %v252
    %v285 = vunpack.c.l.b16 %v253
    %v286 = vunpack.c.l.b16 %v254
    %v287 = vpack.c.b16 %v272, %v271
    %v288 = vpack.c.b16 %v274, %v273
    %v289 = vpack.c.b16 %v276, %v275
    %v290 = vpack.c.b16 %v278, %v277
    %v291 = vpack.c.b16 %v280, %v279
    %v292 = vpack.c.b16 %v282, %v281
    %v293 = vpack.c.b16 %v284, %v283
    %v294 = vpack.c.b16 %v286, %v285
    %303 = vmatprep.subr.bf16.mxu0 0
    %304 = vmatpush1.bf16.msra.mxu0 %v294
    %305 = vmatprep.subr.bf16.mxu0 0
    %306 = vmatpush1.bf16.msra.mxu0 %v293
    %307 = vmatprep.subr.bf16.mxu0 0
    %308 = vmatpush1.bf16.msra.mxu0 %v292
    %309 = vmatprep.subr.bf16.mxu0 0
    %310 = vmatpush1.bf16.msra.mxu0 %v291
    %311 = vmatprep.subr.bf16.mxu0 0
    %312 = vmatpush1.bf16.msra.mxu0 %v290
    %313 = vmatprep.subr.bf16.mxu0 0
    %314 = vmatpush1.bf16.msra.mxu0 %v289
    %315 = vmatprep.subr.bf16.mxu0 0
    %316 = vmatpush1.bf16.msra.mxu0 %v288
    %317 = vmatprep.subr.bf16.mxu0 0
    %318 = vmatpush1.bf16.msra.mxu0 %v287
    %319 = vmatprep.subr.bf16.mxu0 0
    %320 = vmatpush2.bf16.msra.mxu0 0
    %321 = vmatprep.subr.bf16.mxu0 0
    %322 = vmatpush2.bf16.msra.mxu0 0
    %323 = vmatprep.subr.bf16.mxu0 0
    %324 = vmatpush2.bf16.msra.mxu0 0
    %325 = vmatprep.subr.bf16.mxu0 0
    %326 = vmatpush2.bf16.msra.mxu0 0
    %327 = vmatprep.subr.bf16.mxu0 0
    %328 = vmatpush2.bf16.msra.mxu0 0
    %329 = vmatprep.subr.bf16.mxu0 0
    %330 = vmatpush2.bf16.msra.mxu0 0
    %331 = vmatprep.subr.bf16.mxu0 0
    %332 = vmatpush2.bf16.msra.mxu0 0
    %333 = vmatprep.subr.bf16.mxu0 0
    %334 = vmatpush2.bf16.msra.mxu0 0
    %335 = vmatprep.mubr.bf16.mxu0 0
    %336 = vmatmul.mubr.bf16.gmra.mxu0 %v238
    %v337 = vpop.f32.mrf.mxu0
    %v338 = vadd.f32 0.0, %v337
    %v339 = vpop.f32.mrf.mxu0
    %v340 = vpop.f32.mrf.mxu0
    %v341 = vpop.f32.mrf.mxu0
    %342 = vdwg.mxu0
    %v343 = vld [vmem:[#allocation10 + $0x4] sm:$0x1]
    %v344 = vld [vmem:[#allocation10 + $0x5] sm:$0x1]
    %v345 = vrot.slane %v338, 4
    %v346 = vadd.f32 %v338, %v345
    %v347 = vrot.slane %v346, 2
    %v348 = vadd.f32 %v346, %v347
    %v349 = vrot.slane %v348, 1
    %v350 = vadd.f32 %v348, %v349
    %v351 = vmul.f32 %v338, %v338
    %v352 = vrot.slane %v351, 4
    %v353 = vadd.f32 %v351, %v352
    %v354 = vrot.slane %v353, 2
    %v355 = vadd.f32 %v353, %v354
    %v356 = vrot.slane %v355, 1
    %v357 = vadd.f32 %v355, %v356
    %v358 = vmul.f32 %v350, 0.125
    %v359 = vmul.f32 %v357, 0.125
    %v360 = vmul.f32 %v358, %v358
    %v361 = vsub.f32 %v359, %v360
    %v362 = vmax.f32 %v361, 0.0
    %v363 = vadd.f32 %v362, 1e-05
    %v364 = vrsqrt.pop %v363
    %v365 = vmul.f32 %v343, %v364
    %v366 = vmul.f32 %v358, %v365
    %v367 = vsub.f32 %v344, %v366
    %v368 = vlaneseq
    %v369 = vshrl.u32 %v368, 7
    %v370 = vsub.s32 0, %v369
    %v371 = vrot.slane %v365, %v370
    %v372 = vmul.f32 %v338, %v371
    %v373 = vlaneseq
    %v374 = vshrl.u32 %v373, 7
    %v375 = vsub.s32 0, %v374
    %v376 = vrot.slane %v367, %v375
    %v377 = vadd.f32 %v372, %v376
    %v378 = vmax.f32 %v377, 0.0
    %v379 = vpack.c.bf16 %v378, %v378
    %v380 = vld [vmem:[#allocation8] sm:$0xf]
    %v381 = vld [vmem:[#allocation8 + $0x4] sm:$0xf]
    %v382 = vld [vmem:[#allocation8 + $0x8] sm:$0xf]
    %v383 = vld [vmem:[#allocation8 + $0xc] sm:$0xf]
    %v384 = vld [vmem:[#allocation8 + $0x10] sm:$0xf]
    %v385 = vld [vmem:[#allocation8 + $0x14] sm:$0xf]
    %v386 = vld [vmem:[#allocation8 + $0x18] sm:$0xf]
    %v387 = vld [vmem:[#allocation8 + $0x1c] sm:$0xf]
    %v388 = vld [vmem:[#allocation8 + $0x20] sm:$0xf]
    %v389 = vld [vmem:[#allocation8 + $0x24] sm:$0xf]
    %v390 = vld [vmem:[#allocation8 + $0x28] sm:$0xf]
    %v391 = vld [vmem:[#allocation8 + $0x2c] sm:$0xf]
    %v392 = vld [vmem:[#allocation8 + $0x30] sm:$0xf]
    %v393 = vld [vmem:[#allocation8 + $0x34] sm:$0xf]
    %v394 = vld [vmem:[#allocation8 + $0x38] sm:$0xf]
    %v395 = vld [vmem:[#allocation8 + $0x3c] sm:$0xf]
    %v396 = vld [vmem:[#allocation10 + $0x6] sm:$0x1]
    %v397 = vlaneseq
    %v398 = vshrl.u32 %v397, 7
    %v399 = vsub.s32 0, %v398
    %v400 = vrot.slane %v396, %v399
    %v417 = vunpack.c.l.b16 %v380
    %v418 = vunpack.c.l.b16 %v381
    %v419 = vunpack.c.l.b16 %v382
    %v420 = vunpack.c.l.b16 %v383
    %v421 = vunpack.c.l.b16 %v384
    %v422 = vunpack.c.l.b16 %v385
    %v423 = vunpack.c.l.b16 %v386
    %v424 = vunpack.c.l.b16 %v387
    %v425 = vunpack.c.l.b16 %v388
    %v426 = vunpack.c.l.b16 %v389
    %v427 = vunpack.c.l.b16 %v390
    %v428 = vunpack.c.l.b16 %v391
    %v429 = vunpack.c.l.b16 %v392
    %v430 = vunpack.c.l.b16 %v393
    %v431 = vunpack.c.l.b16 %v394
    %v432 = vunpack.c.l.b16 %v395
    %v433 = vpack.c.b16 %v418, %v417
    %v434 = vpack.c.b16 %v420, %v419
    %v435 = vpack.c.b16 %v422, %v421
    %v436 = vpack.c.b16 %v424, %v423
    %v437 = vpack.c.b16 %v426, %v425
    %v438 = vpack.c.b16 %v428, %v427
    %v439 = vpack.c.b16 %v430, %v429
    %v440 = vpack.c.b16 %v432, %v431
    %449 = vmatprep.subr.bf16.mxu0 0
    %450 = vmatpush1.bf16.msra.mxu0 %v440
    %451 = vmatprep.subr.bf16.mxu0 0
    %452 = vmatpush1.bf16.msra.mxu0 %v439
    %453 = vmatprep.subr.bf16.mxu0 0
    %454 = vmatpush1.bf16.msra.mxu0 %v438
    %455 = vmatprep.subr.bf16.mxu0 0
    %456 = vmatpush1.bf16.msra.mxu0 %v437
    %457 = vmatprep.subr.bf16.mxu0 0
    %458 = vmatpush1.bf16.msra.mxu0 %v436
    %459 = vmatprep.subr.bf16.mxu0 0
    %460 = vmatpush1.bf16.msra.mxu0 %v435
    %461 = vmatprep.subr.bf16.mxu0 0
    %462 = vmatpush1.bf16.msra.mxu0 %v434
    %463 = vmatprep.subr.bf16.mxu0 0
    %464 = vmatpush1.bf16.msra.mxu0 %v433
    %465 = vmatprep.subr.bf16.mxu0 0
    %466 = vmatpush2.bf16.msra.mxu0 0
    %467 = vmatprep.subr.bf16.mxu0 0
    %468 = vmatpush2.bf16.msra.mxu0 0
    %469 = vmatprep.subr.bf16.mxu0 0
    %470 = vmatpush2.bf16.msra.mxu0 0
    %471 = vmatprep.subr.bf16.mxu0 0
    %472 = vmatpush2.bf16.msra.mxu0 0
    %473 = vmatprep.subr.bf16.mxu0 0
    %474 = vmatpush2.bf16.msra.mxu0 0
    %475 = vmatprep.subr.bf16.mxu0 0
    %476 = vmatpush2.bf16.msra.mxu0 0
    %477 = vmatprep.subr.bf16.mxu0 0
    %478 = vmatpush2.bf16.msra.mxu0 0
    %479 = vmatprep.subr.bf16.mxu0 0
    %480 = vmatpush2.bf16.msra.mxu0 0
    %481 = vmatprep.mubr.bf16.mxu0 0
    %482 = vmatmul.mubr.bf16.gmra.mxu0 %v379
    %v483 = vpop.f32.mrf.mxu0
    %v484 = vadd.f32 %v400, %v483
    %v485 = vpop.f32.mrf.mxu0
    %v486 = vpop.f32.mrf.mxu0
    %v487 = vpop.f32.mrf.mxu0
    %488 = vdwg.mxu0
    %v489 = vtanh.pop %v484
    %490 = vst [vmem:[#allocation11] sm:$0xff] %v489
    // Predicated region
    $region42: #{actor_forward.1} parent=1 // pred_check
      _
    $region43: #{actor_forward.1} parent=1 // pred_check_branch
      %492 = sbr.rel (0) target = $region45
    $region44: #{actor_forward.1} parent=1 // pred_region
      %s494 = ssub.s32 128, 128
      %495 = vsyncadd [#allocation4], %s494
      %s497 = sshll.u32 [#allocation11], 4
      %s498 = int_to_ptr.vmem [resolvable:$true] %s497
      %500 = dma.vmem_to_hbm [thread:$0]  %s498, 128, %s5, [#allocation4]
    $region45: #{actor_forward.1} parent=1 // pred_fallthru
      _
    // Predicated region
    $region46: #{actor_forward.1} parent=1 // pred_check
      _
    $region47: #{actor_forward.1} parent=1 // pred_check_branch
      %502 = sbr.rel (0) target = $region49
    $region48: #{actor_forward.1} parent=1 // pred_region
      %503 = dma.done [#allocation4], 128
    $region49: #{actor_forward.1} parent=1 // pred_fallthru
      _
    %504 = vsyncpa [#allocation3], 1
    %505 = vsyncpa [#allocation6], 1
    %506 = vsyncpa [#allocation9], 1
    %507 = vsyncpa [#allocation4], 1

</llo_original>
